<compile_context>
chip_gen: v7x
topology: tpu7x:2x2x1
jax: 0.10.0
libtpu: 0.0.40
codegen_flags: <defaults>
</compile_context>

<pallas_src>
import functools

import jax
import jax.numpy as jnp
from jax.experimental import pallas as pl
from jax.experimental.pallas import tpu as pltpu

LANES = 128
MAX_ROW_TILE = 8192          # 8192 x 128 x 4B = 4 MiB per f32 block
WIDE_ACC_ROWS = 64           # (64, 128) f32 accumulator = 32 KiB VMEM


# ---------------------------------------------------------------------------
# Chip-dependent static configuration (host-side, trace-time constants).
# ---------------------------------------------------------------------------
@functools.lru_cache(maxsize=None)
def _device_kind() -> str:
    try:
        return jax.devices()[0].device_kind.lower()
    except Exception:
        return ""


def _reduce_partitions() -> int:
    # Two TensorCores per chip only on v7x; on single-TC v5e/v6e a >1 leading
    # axis is a serial outer loop with a redundant clamped-block DMA.
    return 2 if "v7" in _device_kind() else 1


def _compute_dtype(dtype):
    # v5 VPU/EUP lack bf16; v6e/v7x handle it natively (halves vreg traffic).
    if dtype == jnp.bfloat16 and "v5" not in _device_kind():
        return jnp.bfloat16
    return jnp.float32


def _row_tile(rows: int) -> int:
    return max(8, min(MAX_ROW_TILE, ((rows + 7) // 8) * 8))


def _acc_rows(row_tile: int) -> int:
    return WIDE_ACC_ROWS if row_tile % WIDE_ACC_ROWS == 0 else 8


# ---------------------------------------------------------------------------
# Kernels
# ---------------------------------------------------------------------------
def _entropy_reduce_kernel(x_ref, part_ref, acc_ref, *, row_tile, rows, acc_rows):
    """Per-partition partial sum of -x*log(x) via a wide VMEM accumulator."""
    s = pl.program_id(1)
    n_steps = pl.num_programs(1)

    @pl.when(s == 0)
    def _():
        acc_ref[...] = jnp.zeros_like(acc_ref)

    # Unclamped linear block id (the index_map clamps the actual DMA).
    b = pl.program_id(0) * n_steps + s

    def _accumulate(x):
        ent = -x * jnp.log(x)
        # acc_rows independent add chains (pure VPU adds, latency hidden).
        acc_ref[...] += ent.reshape(-1, acc_rows, LANES).sum(axis=0)

    full_block = (b + 1) * row_tile <= rows

    @pl.when(full_block)
    def _():  # steady state: no mask work at all
        _accumulate(x_ref[...].astype(jnp.float32))

    @pl.when(jnp.logical_not(full_block))
    def _():  # last (partial) block and clamped overflow blocks: masked
        x = x_ref[...].astype(jnp.float32)
        row_ids = b * row_tile + jax.lax.broadcasted_iota(jnp.int32, x.shape, 0)
        x = jnp.where(row_ids < rows, x, 1.0)      # entropy(1) == 0
        _accumulate(x)

    @pl.when(s == n_steps - 1)
    def _():
        # Single cross-lane reduce per partition, once.
        part_ref[0, 0] = jnp.sum(acc_ref[...])


def _entropy_elementwise_kernel(x_ref, o_ref, *, compute_dtype):
    x = x_ref[...].astype(compute_dtype)
    o_ref[...] = (-x * jnp.log(x)).astype(o_ref.dtype)


# ---------------------------------------------------------------------------
# Wrapper
# ---------------------------------------------------------------------------
def _tail_entropy(tail, compute_dtype):
    t = tail.astype(compute_dtype)
    return -t * jnp.log(t)


def entropy_minimization(x, reduction="mean"):
    assert reduction in [None, "none", "mean", "sum"]
    n = x.size
    flat = x.reshape(-1)                 # metadata-only for contiguous x
    aligned = (n // LANES) * LANES       # lane-aligned prefix -> kernel
    rem = n - aligned                    # <128-element tail -> tiny jnp expr
    rows = aligned // LANES

    # -------------------- 'none' / None: elementwise ----------------------
    if reduction is None or reduction == "none":
        cdt = _compute_dtype(x.dtype)
        pieces = []
        if rows:
            rt = _row_tile(rows)
            x2d = flat[:aligned].reshape(rows, LANES)   # free when rem == 0
            out2d = pl.pallas_call(
                functools.partial(_entropy_elementwise_kernel, compute_dtype=cdt),
                out_shape=jax.ShapeDtypeStruct((rows, LANES), x.dtype),
                grid=(pl.cdiv(rows, rt),),
                in_specs=[pl.BlockSpec((rt, LANES), lambda i: (i, 0))],
                out_specs=pl.BlockSpec((rt, LANES), lambda i: (i, 0)),
                compiler_params=pltpu.CompilerParams(
                    dimension_semantics=("parallel",)
                ),
            )(x2d)
            pieces.append(out2d.reshape(-1))
        if rem:
            pieces.append(_tail_entropy(flat[aligned:], cdt).astype(x.dtype))
        out = pieces[0] if len(pieces) == 1 else jnp.concatenate(pieces)
        return out.reshape(x.shape)

    # -------------------- 'mean' / 'sum': fused reduce ---------------------
    total = jnp.zeros((), jnp.float32)
    if rows:
        rt = _row_tile(rows)
        acc_rows = _acc_rows(rt)
        n_blocks = pl.cdiv(rows, rt)
        parts = min(_reduce_partitions(), n_blocks)
        steps = pl.cdiv(n_blocks, parts)
        x2d = flat[:aligned].reshape(rows, LANES)       # free when rem == 0

        def in_map(pi, si):
            # Clamp so the DMA never walks past the slab; zeroed in-kernel.
            return (jnp.minimum(pi * steps + si, n_blocks - 1), 0)

        partials = pl.pallas_call(
            functools.partial(
                _entropy_reduce_kernel, row_tile=rt, rows=rows, acc_rows=acc_rows
            ),
            out_shape=jax.ShapeDtypeStruct((parts, 1), jnp.float32),
            grid=(parts, steps),
            in_specs=[pl.BlockSpec((rt, LANES), in_map)],
            out_specs=pl.BlockSpec(
                (1, 1), lambda pi, si: (pi, 0), memory_space=pltpu.SMEM
            ),
            scratch_shapes=[pltpu.VMEM((acc_rows, LANES), jnp.float32)],
            compiler_params=pltpu.CompilerParams(
                dimension_semantics=("parallel", "arbitrary")
            ),
        )(x2d)
        total = total + jnp.sum(partials)
    if rem:
        total = total + jnp.sum(_tail_entropy(flat[aligned:], jnp.float32))

    if reduction == "mean":
        total = total / n
    return total.astype(x.dtype)


# ---------------------------------------------------------------------------
# Demo / self-check
# ---------------------------------------------------------------------------
if __name__ == "__main__":
    key = jax.random.PRNGKey(0)
    k1, k2 = jax.random.split(key)

    em = jax.jit(entropy_minimization, static_argnames=("reduction",))

    # Probability-like positive inputs, NCHW [2, 4, 16, 16] (softmax over C).
    logits = jax.random.normal(k1, (2, 4, 16, 16), dtype=jnp.float32)
    x = jax.nn.softmax(logits, axis=1)

    out_mean = em(x, reduction="mean")     # module default
    out_sum = em(x, reduction="sum")
    out_none = em(x, reduction="none")

    # Ragged shape (numel not a multiple of 128) to exercise tail handling.
    x2 = jax.random.uniform(
        k2, (3, 5, 7, 11), dtype=jnp.float32, minval=0.05, maxval=1.0
    )
    out2_mean = em(x2, reduction="mean")
    out2_none = em(x2, reduction="none")

    jax.block_until_ready((out_mean, out_sum, out_none, out2_mean, out2_none))

    # Pure-JAX reference.
    ref = -x * jnp.log(x)
    ref2 = -x2 * jnp.log(x2)
    assert jnp.allclose(out_mean, jnp.mean(ref), rtol=1e-5, atol=1e-6)
    assert jnp.allclose(out_sum, jnp.sum(ref), rtol=1e-5, atol=1e-5)
    assert jnp.allclose(out_none, ref, rtol=1e-5, atol=1e-6)
    assert out_none.shape == x.shape and out_none.dtype == x.dtype
    assert jnp.allclose(out2_mean, jnp.mean(ref2), rtol=1e-5, atol=1e-6)
    assert jnp.allclose(out2_none, ref2, rtol=1e-5, atol=1e-6)
    assert out2_none.shape == x2.shape

    print("KERNEL_OK")
</pallas_src>

<mosaic_0001>
module attributes {stable_mosaic.version = 11 : i64} {
  func.func @_entropy_reduce_kernel(%arg0: i32, %arg1: i32, %arg2: memref<16x128xf32, #tpu.memory_space<vmem>>, %arg3: memref<1x1xf32, #tpu.memory_space<smem>>, %arg4: memref<8x128xf32, #tpu.memory_space<vmem>>) attributes {dimension_semantics = [#tpu.dimension_semantics<parallel>, #tpu.dimension_semantics<arbitrary>], iteration_bounds = array<i64: 1, 1>, scalar_prefetch = 0 : i64, scratch_operands = 1 : i64, tpu.core_type = #tpu.core_type<tc>, window_params = [{transform_indices = @transform_0, window_bounds = array<i64: 16, 128>}, {transform_indices = @transform_1, window_bounds = array<i64: 1, 1>}]} {
    %c0_i32 = arith.constant 0 : i32
    %0 = arith.cmpi eq, %arg1, %c0_i32 : i32
    %1 = arith.extui %0 : i1 to i32
    %c0_i32_0 = arith.constant 0 : i32
    %2 = arith.cmpi ne, %1, %c0_i32_0 : i32
    scf.if %2 {
      %cst = arith.constant 0.000000e+00 : f32
      %16 = vector.broadcast %cst : f32 to vector<8x128xf32>
      %c0 = arith.constant 0 : index
      %c0_7 = arith.constant 0 : index
      %17 = vector.load %arg4[%c0, %c0_7] : memref<8x128xf32, #tpu.memory_space<vmem>>, vector<8x128xf32>
      tpu.vector_store %arg4[%c0, %c0_7], %16 {strides = array<i32>} : memref<8x128xf32, #tpu.memory_space<vmem>>, vector<8x128xf32>,
    } else {
    }
    %c1_i32 = arith.constant 1 : i32
    %3 = arith.muli %arg0, %c1_i32 : i32
    %4 = arith.addi %3, %arg1 : i32
    %c1_i32_1 = arith.constant 1 : i32
    %5 = arith.addi %4, %c1_i32_1 : i32
    %c16_i32 = arith.constant 16 : i32
    %6 = arith.muli %5, %c16_i32 : i32
    %c16_i32_2 = arith.constant 16 : i32
    %7 = arith.cmpi sle, %6, %c16_i32_2 : i32
    %8 = arith.extui %7 : i1 to i32
    %c0_i32_3 = arith.constant 0 : i32
    %9 = arith.cmpi ne, %8, %c0_i32_3 : i32
    scf.if %9 {
      %c0 = arith.constant 0 : index
      %c0_7 = arith.constant 0 : index
      %16 = vector.load %arg2[%c0, %c0_7] : memref<16x128xf32, #tpu.memory_space<vmem>>, vector<16x128xf32>
      %cst = arith.constant 0.000000e+00 : f32
      %17 = vector.broadcast %cst : f32 to vector<16x128xf32>
      %18 = arith.subf %17, %16 : vector<16x128xf32>
      %19 = math.log %16 : vector<16x128xf32>
      %20 = arith.mulf %18, %19 : vector<16x128xf32>
      %c0_8 = arith.constant 0 : index
      %c0_9 = arith.constant 0 : index
      %21 = vector.load %arg4[%c0_8, %c0_9] : memref<8x128xf32, #tpu.memory_space<vmem>>, vector<8x128xf32>
      %22 = vector.shape_cast %20 : vector<16x128xf32> to vector<2x8x128xf32>
      %cst_10 = arith.constant dense<0.000000e+00> : vector<8x128xf32>
      %23 = vector.multi_reduction <add>, %22, %cst_10 [0] : vector<2x8x128xf32> to vector<8x128xf32>
      %24 = arith.addf %21, %23 : vector<8x128xf32>
      %c0_11 = arith.constant 0 : index
      %c0_12 = arith.constant 0 : index
      %25 = vector.load %arg4[%c0_11, %c0_12] : memref<8x128xf32, #tpu.memory_space<vmem>>, vector<8x128xf32>
      tpu.vector_store %arg4[%c0_11, %c0_12], %24 {strides = array<i32>} : memref<8x128xf32, #tpu.memory_space<vmem>>, vector<8x128xf32>,
    } else {
    }
    %true = arith.constant true
    %10 = arith.xori %7, %true : i1
    %11 = arith.extui %10 : i1 to i32
    %c0_i32_4 = arith.constant 0 : i32
    %12 = arith.cmpi ne, %11, %c0_i32_4 : i32
    scf.if %12 {
      %c0 = arith.constant 0 : index
      %c0_7 = arith.constant 0 : index
      %16 = vector.load %arg2[%c0, %c0_7] : memref<16x128xf32, #tpu.memory_space<vmem>>, vector<16x128xf32>
      %c16_i32_8 = arith.constant 16 : i32
      %17 = arith.muli %4, %c16_i32_8 : i32
      %18 = tpu.iota {dimensions = array<i32: 0>} : vector<16x128xi32>
      %19 = vector.broadcast %17 : i32 to vector<16x128xi32>
      %20 = arith.addi %19, %18 : vector<16x128xi32>
      %c16_i32_9 = arith.constant 16 : i32
      %21 = vector.broadcast %c16_i32_9 : i32 to vector<16x128xi32>
      %22 = arith.cmpi slt, %20, %21 : vector<16x128xi32>
      %cst = arith.constant 1.000000e+00 : f32
      %23 = vector.broadcast %cst : f32 to vector<16x128xf32>
      %24 = arith.select %22, %16, %23 : vector<16x128xi1>, vector<16x128xf32>
      %cst_10 = arith.constant 0.000000e+00 : f32
      %25 = vector.broadcast %cst_10 : f32 to vector<16x128xf32>
      %26 = arith.subf %25, %24 : vector<16x128xf32>
      %27 = math.log %24 : vector<16x128xf32>
      %28 = arith.mulf %26, %27 : vector<16x128xf32>
      %c0_11 = arith.constant 0 : index
      %c0_12 = arith.constant 0 : index
      %29 = vector.load %arg4[%c0_11, %c0_12] : memref<8x128xf32, #tpu.memory_space<vmem>>, vector<8x128xf32>
      %30 = vector.shape_cast %28 : vector<16x128xf32> to vector<2x8x128xf32>
      %cst_13 = arith.constant dense<0.000000e+00> : vector<8x128xf32>
      %31 = vector.multi_reduction <add>, %30, %cst_13 [0] : vector<2x8x128xf32> to vector<8x128xf32>
      %32 = arith.addf %29, %31 : vector<8x128xf32>
      %c0_14 = arith.constant 0 : index
      %c0_15 = arith.constant 0 : index
      %33 = vector.load %arg4[%c0_14, %c0_15] : memref<8x128xf32, #tpu.memory_space<vmem>>, vector<8x128xf32>
      tpu.vector_store %arg4[%c0_14, %c0_15], %32 {strides = array<i32>} : memref<8x128xf32, #tpu.memory_space<vmem>>, vector<8x128xf32>,
    } else {
    }
    %c0_i32_5 = arith.constant 0 : i32
    %13 = arith.cmpi eq, %arg1, %c0_i32_5 : i32
    %14 = arith.extui %13 : i1 to i32
    %c0_i32_6 = arith.constant 0 : i32
    %15 = arith.cmpi ne, %14, %c0_i32_6 : i32
    scf.if %15 {
      %c0 = arith.constant 0 : index
      %c0_7 = arith.constant 0 : index
      %16 = vector.load %arg4[%c0, %c0_7] : memref<8x128xf32, #tpu.memory_space<vmem>>, vector<8x128xf32>
      %17 = vector.shape_cast %16 : vector<8x128xf32> to vector<1x8x128xf32>
      %cst = arith.constant dense<0.000000e+00> : vector<1xf32>
      %18 = vector.multi_reduction <add>, %17, %cst [1, 2] : vector<1x8x128xf32> to vector<1xf32>
      %19 = vector.shape_cast %18 : vector<1xf32> to vector<1x1x1xf32>
      %20 = vector.extract %19[0, 0, 0] : f32 from vector<1x1x1xf32>
      %c0_8 = arith.constant 0 : index
      %c0_9 = arith.constant 0 : index
      %21 = memref.load %arg3[%c0_8, %c0_9] : memref<1x1xf32, #tpu.memory_space<smem>>
      memref.store %20, %arg3[%c0_8, %c0_9] : memref<1x1xf32, #tpu.memory_space<smem>>
    } else {
    }
    return
  }
  func.func @transform_0(%arg0: i32, %arg1: i32) -> (i32, i32) {
    %c1_i32 = arith.constant 1 : i32
    %0 = arith.muli %arg0, %c1_i32 : i32
    %1 = arith.addi %0, %arg1 : i32
    %c0_i32 = arith.constant 0 : i32
    %2 = arith.minsi %1, %c0_i32 : i32
    %c0_i32_0 = arith.constant 0 : i32
    %c0_i32_1 = arith.constant 0 : i32
    return %2, %c0_i32_0 : i32, i32
  }
  func.func @transform_1(%arg0: i32, %arg1: i32) -> (i32, i32) {
    %c0_i32 = arith.constant 0 : i32
    %c0_i32_0 = arith.constant 0 : i32
    return %arg0, %c0_i32 : i32, i32
  }
}

</mosaic_0001>

<llo_original>
// kernel: entropy_minimization.1
$region0: #{entropy_minimization.1}
  #allocation0 [shape = 'u32[]', space=smem, size = 0x4, offset = 0x4, fixed_abs, tag = 'smem constant byte address 0x4 - core index']
  #allocation1 [shape = 'u32[144,128]{1,0:T(1,128)}', space=vmem, size = 0x12000, scoped, tag = 'internal scratch']
  #allocation2 [shape = 'f32[8,128]{1,0:T(8,128)}', space=vmem, size = 0x1000, scoped, tag = 'scratch operand']
  %s0 = inlined_call_operand.vmem [shape: f32[16,128], index: 0, kind: input, shape index: {}]
  %s1 = inlined_call_operand.hbm [shape: f32[1,1], index: 1, kind: output, shape index: {}]
  %s2 = sld [smem:[#allocation0]]
  $region30: #{entropy_minimization.1} parent=0
    _
  %s4 = ssub.s32 1, %s2
  %s5 = scalar_select 0, %s4, %s2
  $region1: #{entropy_minimization.1} parent=0
    #allocation3 [shape = 'u8[512]{0}', space=smem, size = 0x200, scoped, tag = 'output window, operand 0, single buffered']
    #allocation4 [shape = 's32[1]{0}', space=sflag, size = 0x4, scoped, tag = 'scoped memory for entropy_minimization.1']
    %6 = vsyncpa [#allocation4], 0
    // Predicated region
    $region2: #{entropy_minimization.1} parent=1 // pred_check
      _
    $region3: #{entropy_minimization.1} parent=1 // pred_check_branch
      %8 = sbr.rel (0) target = $region5
    $region4: #{entropy_minimization.1} parent=1 // pred_region
      %s9 = sadd.s32 0, 0
      %p10 = scmp.lt.s32.totalorder %s9, 0
      %s11 = scalar_select %p10, %s9, 0
      %s12 = smul.u32 2, %s11
      %p13 = scmp.lt.s32.totalorder %s12, 1
      %s14 = scalar_select %p13, %s12, 1
      %s15 = smul.addr %s14, 8
      %s16 = scalar_lea.vmem %s0, %s15
      %s17 = sadd.s32 0, 0
      %p18 = scmp.lt.s32.totalorder %s17, 0
      %s19 = scalar_select %p18, %s17, 0
      %s20 = smul.u32 2, %s19
    $region5: #{entropy_minimization.1} parent=1 // pred_fallthru
      _
    %s21 = sadd.s32 0, 0
    %p22 = scmp.lt.s32.totalorder %s21, 0
    %s23 = scalar_select %p22, %s21, 0
    %s24 = smul.u32 2, %s23
    %p25 = scmp.lt.s32.totalorder %s24, 1
    %s26 = scalar_select %p25, %s24, 1
    %s27 = smul.addr %s26, 8
    %s28 = scalar_lea.vmem %s0, %s27
    %s29 = sadd.s32 0, 0
    %p30 = scmp.lt.s32.totalorder %s29, 0
    %s31 = scalar_select %p30, %s29, 0
    %s32 = smul.u32 2, %s31
    %p33 = scmp.lt.s32.totalorder %s32, 1
    %s34 = scalar_select %p33, %s32, 1
    %s35 = smul.addr %s34, 8
    %s36 = scalar_lea.vmem %s0, %s35
    %s37 = sadd.s32 0, 0
    %p38 = scmp.lt.s32.totalorder %s37, 0
    %s39 = scalar_select %p38, %s37, 0
    %s40 = smul.u32 2, %s39
    %p41 = scmp.eq.s32.totalorder 0, 0
    // Predicated region
    $region6: #{entropy_minimization.1} parent=1 // pred_check
      %p42 = pneg %p41
    $region7: #{entropy_minimization.1} parent=1 // pred_check_branch
      %44 = sbr.rel (%p42) target = $region9
    $region8: #{entropy_minimization.1} parent=1 // pred_region
      %45 = vst [vmem:[#allocation2] sm:$0xff] 0.0
    $region9: #{entropy_minimization.1} parent=1 // pred_fallthru
      _
    %s46 = sadd.s32 0, 0
    %s47 = sadd.s32 %s46, 1
    %s48 = smul.u32 %s47, 16
    %p49 = scmp.le.s32.totalorder %s48, 16
    // Predicated region
    $region10: #{entropy_minimization.1} parent=1 // pred_check
      %p50 = pneg %p49
    $region11: #{entropy_minimization.1} parent=1 // pred_check_branch
      %52 = sbr.rel (%p50) target = $region13
    $region12: #{entropy_minimization.1} parent=1 // pred_region
      %v53 = vld [vmem:[%s36] sm:$0xff]
      %v54 = vld [vmem:[%s36 + $0x8] sm:$0xff]
      %v55 = vsub.f32 0.0, %v53
      %v56 = vsub.f32 0.0, %v54
      %v57 = vlog2.pop %v53
      %v58 = vmul.f32 %v57, 0.6931472
      %v59 = vlog2.pop %v54
      %v60 = vmul.f32 %v59, 0.6931472
      %v61 = vmul.f32 %v55, %v58
      %v62 = vmul.f32 %v56, %v60
      %v63 = vld [vmem:[#allocation2] sm:$0xff]
      %v64 = vadd.f32 %v61, %v62
      %v65 = vadd.f32 %v63, %v64
      %66 = vst [vmem:[#allocation2] sm:$0xff] %v65
    $region13: #{entropy_minimization.1} parent=1 // pred_fallthru
      _
    %p67 = scmp.gt.s32.totalorder %s48, 16
    // Predicated region
    $region14: #{entropy_minimization.1} parent=1 // pred_check
      %p68 = pneg %p67
    $region15: #{entropy_minimization.1} parent=1 // pred_check_branch
      %70 = sbr.rel (%p68) target = $region17
    $region16: #{entropy_minimization.1} parent=1 // pred_region
      %v71 = vld [vmem:[%s36] sm:$0xff]
      %v72 = vld [vmem:[%s36 + $0x8] sm:$0xff]
      %s73 = smul.u32 %s46, 16
      %v74 = vlaneseq
      %v75 = vshrl.u32 %v74, 7
      %v76 = vadd.s32 %v75, 8
      %v77 = vstv %s73
      %v78 = vadd.s32 %v77, %v75
      %v79 = vadd.s32 %v77, %v76
      %vm80 = vcmp.lt.s32.totalorder %v78, 16
      %vm81 = vcmp.lt.s32.totalorder %v79, 16
      %v82 = vsel %vm80, %v71, 1.0
      %v83 = vsel %vm81, %v72, 1.0
      %v84 = vsub.f32 0.0, %v82
      %v85 = vsub.f32 0.0, %v83
      %v86 = vlog2.pop %v82
      %v87 = vmul.f32 %v86, 0.6931472
      %v88 = vlog2.pop %v83
      %v89 = vmul.f32 %v88, 0.6931472
      %v90 = vmul.f32 %v84, %v87
      %v91 = vmul.f32 %v85, %v89
      %v92 = vld [vmem:[#allocation2] sm:$0xff]
      %v93 = vadd.f32 %v90, %v91
      %v94 = vadd.f32 %v92, %v93
      %95 = vst [vmem:[#allocation2] sm:$0xff] %v94
    $region17: #{entropy_minimization.1} parent=1 // pred_fallthru
      _
    // Predicated region
    $region18: #{entropy_minimization.1} parent=1 // pred_check
      %p96 = pneg %p41
    $region19: #{entropy_minimization.1} parent=1 // pred_check_branch
      %98 = sbr.rel (%p96) target = $region21
    $region20: #{entropy_minimization.1} parent=1 // pred_region
      %v99 = vld [vmem:[#allocation2] sm:$0xff]
      %100 = vadd.xlane.f32.xlu0 %v99
      %v101 = vpop.xlane.xlu0 %100
      %v102 = vrot.slane %v101, 4
      %v103 = vadd.f32 %v101, %v102
      %v104 = vrot.slane %v103, 2
      %v105 = vadd.f32 %v103, %v104
      %v106 = vrot.slane %v105, 1
      %v107 = vadd.f32 %v105, %v106
      %s108 = vtos %v107
      %s109 = scalar_lea.smem [#allocation3], 0
      %110 = sst [smem:[%s109]] %s108
    $region21: #{entropy_minimization.1} parent=1 // pred_fallthru
      _
    // Predicated region
    $region22: #{entropy_minimization.1} parent=1 // pred_check
      _
    $region23: #{entropy_minimization.1} parent=1 // pred_check_branch
      %112 = sbr.rel (0) target = $region25
    $region24: #{entropy_minimization.1} parent=1 // pred_region
      %s114 = ssub.s32 16, 16
      %115 = vsyncadd [#allocation4], %s114
      %118 = dma.smem_to_hbm [#allocation3], 16, %s1, [#allocation4]
    $region25: #{entropy_minimization.1} parent=1 // pred_fallthru
      _
    // Predicated region
    $region26: #{entropy_minimization.1} parent=1 // pred_check
      _
    $region27: #{entropy_minimization.1} parent=1 // pred_check_branch
      %120 = sbr.rel (0) target = $region29
    $region28: #{entropy_minimization.1} parent=1 // pred_region
      %121 = dma.done [#allocation4], 16
    $region29: #{entropy_minimization.1} parent=1 // pred_fallthru
      _
    %122 = sfence
    %123 = vsyncpa [#allocation4], 1

</llo_original>
